<compile_context>
chip_gen: v6e
topology: v6e:2x2x1
jax: 0.10.0
libtpu: 0.0.40
codegen_flags: <defaults>
</compile_context>

<pallas_src>
import functools

import jax
import jax.numpy as jnp
from jax.experimental import pallas as pl
from jax.experimental.pallas import tpu as pltpu


# f32 param-slab row layout (lanes = fc2_units = fcs1_units = 128):
#   row 0: b1        row 3: b2
#   row 1: gamma     row 4: w3 row (fc3 weight, [H])
#   row 2: beta      row 5: b3 (broadcast across lanes)
#   rows 6 .. 6+A-1: fc2 action-half rows (rank-1 FMA weights, v5e path)
_B1, _GAMMA, _BETA, _B2, _W3, _B3, _W2A0 = 0, 1, 2, 3, 4, 5, 6


def critic_kernel(sa_ref, wslab_ref, pslab_ref, out_ref, *,
                  s_dim, n_act, fold_action):
    """One grid step == one critic head.

    sa_ref    : [B, H]   f32   packed state (lanes 0..S-1) + action (S..S+A-1)
    wslab_ref : [3H, H]  bf16  rows 0..H-1   : W1^T zero-padded to K=H
                               rows H..2H-1  : fc2 state-half (W2s^T)
                               rows 2H..3H-1 : fc2 action-half placed at rows 2H+S..
    pslab_ref : [16, H]  f32   small params (see row layout above)
    out_ref   : [B, H]   f32   q broadcast across lanes (lane-dense store)
    """
    H = out_ref.shape[-1]
    sa = sa_ref[...]                              # [B, H] f32
    p = pslab_ref[...]                            # [16, H] f32

    b1 = p[_B1:_B1 + 1, :]
    gamma = p[_GAMMA:_GAMMA + 1, :]
    beta = p[_BETA:_BETA + 1, :]
    b2 = p[_B2:_B2 + 1, :]
    w3_row = p[_W3:_W3 + 1, :]
    b3 = p[_B3:_B3 + 1, 0:1]                      # [1, 1]

    sa_bf = sa.astype(jnp.bfloat16)

    # --- fcs1 + ReLU: packed-sa @ W1_padded (action rows of W1_padded are zero,
    #     so the action lanes contribute nothing).  bf16 MXU operands, f32 acc.
    xs = jnp.dot(sa_bf, wslab_ref[0:H, :],
                 preferred_element_type=jnp.float32) + b1
    xs = jnp.maximum(xs, 0.0)

    # --- BatchNorm1d (training mode: batch mean / biased var, eps=1e-5),
    #     affine fused into one scale/shift.
    # TODO(synk): running_mean / running_var (momentum 0.1) are not updated here
    # (forward output only); B=1 edge case also normalizes with var=0 instead of
    # raising like PyTorch.
    mean = jnp.mean(xs, axis=0, keepdims=True)
    d = xs - mean
    var = jnp.mean(d * d, axis=0, keepdims=True)
    scale = gamma * jax.lax.rsqrt(var + 1e-5)
    shift = beta - mean * scale
    xs_n = xs * scale + shift

    # --- fc2 on concat([xs, action]) ---
    acc = jnp.dot(xs_n.astype(jnp.bfloat16), wslab_ref[H:2 * H, :],
                  preferred_element_type=jnp.float32) + b2
    if fold_action:
        # v6e/v7x: action half as a second K=128 MXU matmul against the packed
        # sa operand (action weights sit at rows 2H+S..2H+S+A-1, rest zero).
        acc = acc + jnp.dot(sa_bf, wslab_ref[2 * H:3 * H, :],
                            preferred_element_type=jnp.float32)
    else:
        # v5e: action half (K = n_act, tiny) as rank-1 VPU FMAs (static unroll).
        for k in range(n_act):
            acc = acc + sa[:, s_dim + k:s_dim + k + 1] * p[_W2A0 + k:_W2A0 + k + 1, :]
    x = jnp.maximum(acc, 0.0)

    # --- fc3 (out_features = 1): VPU multiply + lane reduction, no 1-lane MXU
    #     pass.  Broadcast q across lanes so the store is lane-dense/unmasked.
    q = jnp.sum(x * w3_row, axis=-1, keepdims=True) + b3          # [B, 1]
    out_ref[...] = jnp.broadcast_to(q, out_ref.shape)


def critic_forward(state, action, params, *, fold_action=None):
    """state: [B, S] f32, action: [B, A] f32 -> q: [n_heads, B, 1] f32."""
    wslab, pslab = params
    N = wslab.shape[0]
    H = wslab.shape[-1]
    B, S = state.shape
    A = action.shape[1]
    assert wslab.shape[1] == 3 * H and S + A <= H

    if fold_action is None:
        kind = jax.devices()[0].device_kind.lower()
        fold_action = ("v6" in kind) or ("v7" in kind)

    # Pack state + action into one lane-dense [B, H] operand (wrapper-side,
    # single cheap XLA op; removes one kernel operand).
    sa = jnp.zeros((B, H), jnp.float32)
    sa = sa.at[:, :S].set(state.astype(jnp.float32))
    sa = sa.at[:, S:S + A].set(action.astype(jnp.float32))

    out = pl.pallas_call(
        functools.partial(critic_kernel, s_dim=S, n_act=A,
                          fold_action=fold_action),
        out_shape=jax.ShapeDtypeStruct((N, B, H), jnp.float32),
        grid=(N,),
        in_specs=[
            pl.BlockSpec((B, H), lambda h: (0, 0)),                    # shared
            pl.BlockSpec((None, 3 * H, H), lambda h: (h, 0, 0)),       # per-head bf16 weights
            pl.BlockSpec((None, pslab.shape[1], H), lambda h: (h, 0, 0)),  # per-head f32 params
        ],
        out_specs=pl.BlockSpec((None, B, H), lambda h: (h, 0, 0)),
        compiler_params=pltpu.CompilerParams(
            dimension_semantics=("parallel",)),                        # v7x: 2 TCs
    )(sa, wslab, pslab)
    return out[:, :, :1]


def init_params(key, state_size, action_size, n_heads=2, hidden=128):
    """PyTorch-equivalent init for `n_heads` critics, repacked for the kernel.

    Returns:
      wslab: [N, 3H, H] bf16  (W1 padded to K=H | fc2 state-half | fc2 action-half placed)
      pslab: [N, 16, H] f32   (small params + fc2 action-half rows for the FMA path)
    """
    S, A, H = state_size, action_size, hidden
    assert S + A <= H
    wslabs, pslabs = [], []
    for hk in jax.random.split(key, n_heads):
        ks = jax.random.split(hk, 6)
        lim = 1.0 / (float(H) ** 0.5)     # hidden_init uses weight.size()[0]
        w1 = jax.random.uniform(ks[0], (H, S), jnp.float32, -lim, lim)
        b1 = jax.random.uniform(ks[1], (H,), jnp.float32, -lim, lim)
        w2 = jax.random.uniform(ks[2], (H, H + A), jnp.float32, -lim, lim)
        b2 = jax.random.uniform(ks[3], (H,), jnp.float32, -lim, lim)
        w3 = jax.random.uniform(ks[4], (1, H), jnp.float32, -0.003, 0.003)
        b3 = jax.random.uniform(ks[5], (1,), jnp.float32, -0.003, 0.003)
        gamma = jnp.ones((H,), jnp.float32)
        beta = jnp.zeros((H,), jnp.float32)

        wslab = jnp.zeros((3 * H, H), jnp.float32)
        wslab = wslab.at[:S, :].set(w1.T)                               # fc1, K padded to H
        wslab = wslab.at[H:2 * H, :].set(w2[:, :H].T)                   # fc2 state half
        wslab = wslab.at[2 * H + S:2 * H + S + A, :].set(w2[:, H:].T)   # fc2 action half (MXU path)
        wslabs.append(wslab.astype(jnp.bfloat16))

        pslab = jnp.zeros((16, H), jnp.float32)
        pslab = pslab.at[_B1].set(b1)
        pslab = pslab.at[_GAMMA].set(gamma)
        pslab = pslab.at[_BETA].set(beta)
        pslab = pslab.at[_B2].set(b2)
        pslab = pslab.at[_W3].set(w3[0])
        pslab = pslab.at[_B3].set(jnp.full((H,), b3[0], jnp.float32))
        pslab = pslab.at[_W2A0:_W2A0 + A].set(w2[:, H:].T)              # fc2 action half (FMA path)
        pslabs.append(pslab)
    return jnp.stack(wslabs), jnp.stack(pslabs)


def critic_reference(state, action, params, *, fold_action):
    """Pure-JAX reference mirroring the kernel math (same packed bf16 weights)."""
    wslab, pslab = params
    N, _, H = wslab.shape
    B, S = state.shape
    A = action.shape[1]
    sa = jnp.zeros((B, H), jnp.float32)
    sa = sa.at[:, :S].set(state).at[:, S:S + A].set(action)
    sa_bf = sa.astype(jnp.bfloat16)
    outs = []
    for h in range(N):
        w, p = wslab[h], pslab[h]
        b1, gamma, beta = p[_B1:_B1 + 1], p[_GAMMA:_GAMMA + 1], p[_BETA:_BETA + 1]
        b2, w3_row, b3 = p[_B2:_B2 + 1], p[_W3:_W3 + 1], p[_B3, 0]
        xs = jnp.dot(sa_bf, w[:H], preferred_element_type=jnp.float32) + b1
        xs = jnp.maximum(xs, 0.0)
        mean = jnp.mean(xs, axis=0, keepdims=True)
        var = jnp.mean((xs - mean) ** 2, axis=0, keepdims=True)
        scale = gamma * jax.lax.rsqrt(var + 1e-5)
        shift = beta - mean * scale
        xs_n = xs * scale + shift
        acc = jnp.dot(xs_n.astype(jnp.bfloat16), w[H:2 * H],
                      preferred_element_type=jnp.float32) + b2
        if fold_action:
            acc = acc + jnp.dot(sa_bf, w[2 * H:3 * H],
                                preferred_element_type=jnp.float32)
        else:
            for k in range(A):
                acc = acc + sa[:, S + k:S + k + 1] * p[_W2A0 + k:_W2A0 + k + 1, :]
        x = jnp.maximum(acc, 0.0)
        outs.append(jnp.sum(x * w3_row, axis=-1, keepdims=True) + b3)
    return jnp.stack(outs)


if __name__ == "__main__":
    # Reacher-like dims, kept small: state_size=33, action_size=4, batch=8,
    # two heads (online critic + target critic) fused into one pallas_call.
    B, S, A = 8, 33, 4
    key = jax.random.PRNGKey(0)
    k_state, k_action, k_params = jax.random.split(key, 3)

    state = jax.random.normal(k_state, (B, S), jnp.float32)
    action = jax.random.uniform(k_action, (B, A), jnp.float32, -1.0, 1.0)
    params = init_params(k_params, S, A, n_heads=2)

    kind = jax.devices()[0].device_kind.lower()
    fold = ("v6" in kind) or ("v7" in kind)   # v5e keeps the rank-1 FMA path

    q = critic_forward(state, action, params, fold_action=fold)
    q = jax.block_until_ready(q)

    q_ref = critic_reference(state, action, params, fold_action=fold)
    assert q.shape == (2, B, 1)
    assert jnp.allclose(q, q_ref, atol=1e-4, rtol=1e-3), (q, q_ref)
    print("KERNEL_OK")
</pallas_src>

<mosaic_0001>
module attributes {stable_mosaic.version = 11 : i64} {
  func.func @critic_kernel(%arg0: i32, %arg1: memref<8x128xf32, #tpu.memory_space<vmem>>, %arg2: memref<1x384x128xbf16, #tpu.memory_space<vmem>>, %arg3: memref<1x16x128xf32, #tpu.memory_space<vmem>>, %arg4: memref<1x8x128xf32, #tpu.memory_space<vmem>>) attributes {dimension_semantics = [#tpu.dimension_semantics<parallel>], iteration_bounds = array<i64: 2>, scalar_prefetch = 0 : i64, scratch_operands = 0 : i64, tpu.core_type = #tpu.core_type<tc>, window_params = [{pipeline_mode = #tpu.pipeline_mode<synchronous>, transform_indices = @transform_0, window_bounds = array<i64: 8, 128>}, {transform_indices = @transform_1, window_bounds = array<i64: 1, 384, 128>}, {transform_indices = @transform_2, window_bounds = array<i64: 1, 16, 128>}, {transform_indices = @transform_3, window_bounds = array<i64: 1, 8, 128>}]} {
    %c0 = arith.constant 0 : index
    %c0_0 = arith.constant 0 : index
    %0 = vector.load %arg1[%c0, %c0_0] : memref<8x128xf32, #tpu.memory_space<vmem>>, vector<8x128xf32>
    %c0_1 = arith.constant 0 : index
    %c0_2 = arith.constant 0 : index
    %c0_3 = arith.constant 0 : index
    %1 = vector.load %arg3[%c0_1, %c0_2, %c0_3] : memref<1x16x128xf32, #tpu.memory_space<vmem>>, vector<1x16x128xf32>
    %2 = vector.shape_cast %1 : vector<1x16x128xf32> to vector<16x128xf32>
    %3 = vector.extract_strided_slice %2 {offsets = [0, 0], sizes = [1, 128], strides = [1, 1]} : vector<16x128xf32> to vector<1x128xf32>
    %4 = vector.extract_strided_slice %2 {offsets = [1, 0], sizes = [1, 128], strides = [1, 1]} : vector<16x128xf32> to vector<1x128xf32>
    %5 = vector.extract_strided_slice %2 {offsets = [2, 0], sizes = [1, 128], strides = [1, 1]} : vector<16x128xf32> to vector<1x128xf32>
    %6 = vector.extract_strided_slice %2 {offsets = [3, 0], sizes = [1, 128], strides = [1, 1]} : vector<16x128xf32> to vector<1x128xf32>
    %7 = vector.extract_strided_slice %2 {offsets = [4, 0], sizes = [1, 128], strides = [1, 1]} : vector<16x128xf32> to vector<1x128xf32>
    %8 = vector.extract_strided_slice %2 {offsets = [5, 0], sizes = [1, 1], strides = [1, 1]} : vector<16x128xf32> to vector<1x1xf32>
    %9 = arith.truncf %0 : vector<8x128xf32> to vector<8x128xbf16>
    %c0_4 = arith.constant 0 : index
    %c0_5 = arith.constant 0 : index
    %c0_6 = arith.constant 0 : index
    %10 = vector.load %arg2[%c0_4, %c0_5, %c0_6] : memref<1x384x128xbf16, #tpu.memory_space<vmem>>, vector<1x128x128xbf16>
    %11 = vector.shape_cast %10 : vector<1x128x128xbf16> to vector<128x128xbf16>
    %cst = arith.constant dense<0.000000e+00> : vector<8x128xf32>
    %12 = tpu.matmul %9, %11, %cst {dimension_numbers = #tpu.dot_dimension_numbers<[1], [0], [0], [1], [0, 0, 1, 1], [], []>} : vector<8x128xbf16>, vector<128x128xbf16>, vector<8x128xf32> -> vector<8x128xf32>
    %13 = vector.broadcast %3 : vector<1x128xf32> to vector<8x128xf32>
    %14 = arith.addf %12, %13 : vector<8x128xf32>
    %cst_7 = arith.constant 0.000000e+00 : f32
    %15 = vector.broadcast %cst_7 : f32 to vector<8x128xf32>
    %16 = arith.maximumf %14, %15 : vector<8x128xf32>
    %cst_8 = arith.constant dense<0.000000e+00> : vector<128xf32>
    %17 = vector.multi_reduction <add>, %16, %cst_8 [0] : vector<8x128xf32> to vector<128xf32>
    %18 = vector.shape_cast %17 : vector<128xf32> to vector<1x128xf32>
    %cst_9 = arith.constant 8.000000e+00 : f32
    %19 = vector.broadcast %cst_9 : f32 to vector<1x128xf32>
    %20 = arith.divf %18, %19 : vector<1x128xf32>
    %21 = vector.broadcast %20 : vector<1x128xf32> to vector<8x128xf32>
    %22 = arith.subf %16, %21 : vector<8x128xf32>
    %23 = arith.mulf %22, %22 : vector<8x128xf32>
    %cst_10 = arith.constant dense<0.000000e+00> : vector<128xf32>
    %24 = vector.multi_reduction <add>, %23, %cst_10 [0] : vector<8x128xf32> to vector<128xf32>
    %25 = vector.shape_cast %24 : vector<128xf32> to vector<1x128xf32>
    %cst_11 = arith.constant 8.000000e+00 : f32
    %26 = vector.broadcast %cst_11 : f32 to vector<1x128xf32>
    %27 = arith.divf %25, %26 : vector<1x128xf32>
    %cst_12 = arith.constant 9.99999974E-6 : f32
    %28 = vector.broadcast %cst_12 : f32 to vector<1x128xf32>
    %29 = arith.addf %27, %28 : vector<1x128xf32>
    %30 = math.rsqrt %29 : vector<1x128xf32>
    %31 = arith.mulf %4, %30 : vector<1x128xf32>
    %32 = arith.mulf %20, %31 : vector<1x128xf32>
    %33 = arith.subf %5, %32 : vector<1x128xf32>
    %34 = vector.broadcast %31 : vector<1x128xf32> to vector<8x128xf32>
    %35 = arith.mulf %16, %34 : vector<8x128xf32>
    %36 = vector.broadcast %33 : vector<1x128xf32> to vector<8x128xf32>
    %37 = arith.addf %35, %36 : vector<8x128xf32>
    %38 = arith.truncf %37 : vector<8x128xf32> to vector<8x128xbf16>
    %c0_13 = arith.constant 0 : index
    %c128 = arith.constant 128 : index
    %c0_14 = arith.constant 0 : index
    %39 = vector.load %arg2[%c0_13, %c128, %c0_14] : memref<1x384x128xbf16, #tpu.memory_space<vmem>>, vector<1x128x128xbf16>
    %40 = vector.shape_cast %39 : vector<1x128x128xbf16> to vector<128x128xbf16>
    %cst_15 = arith.constant dense<0.000000e+00> : vector<8x128xf32>
    %41 = tpu.matmul %38, %40, %cst_15 {dimension_numbers = #tpu.dot_dimension_numbers<[1], [0], [0], [1], [0, 0, 1, 1], [], []>} : vector<8x128xbf16>, vector<128x128xbf16>, vector<8x128xf32> -> vector<8x128xf32>
    %42 = vector.broadcast %6 : vector<1x128xf32> to vector<8x128xf32>
    %43 = arith.addf %41, %42 : vector<8x128xf32>
    %44 = vector.extract_strided_slice %0 {offsets = [0, 33], sizes = [8, 1], strides = [1, 1]} : vector<8x128xf32> to vector<8x1xf32>
    %45 = vector.extract_strided_slice %2 {offsets = [6, 0], sizes = [1, 128], strides = [1, 1]} : vector<16x128xf32> to vector<1x128xf32>
    %46 = vector.broadcast %44 : vector<8x1xf32> to vector<8x128xf32>
    %47 = vector.broadcast %45 : vector<1x128xf32> to vector<8x128xf32>
    %48 = arith.mulf %46, %47 : vector<8x128xf32>
    %49 = arith.addf %43, %48 : vector<8x128xf32>
    %50 = vector.extract_strided_slice %0 {offsets = [0, 34], sizes = [8, 1], strides = [1, 1]} : vector<8x128xf32> to vector<8x1xf32>
    %51 = vector.extract_strided_slice %2 {offsets = [7, 0], sizes = [1, 128], strides = [1, 1]} : vector<16x128xf32> to vector<1x128xf32>
    %52 = vector.broadcast %50 : vector<8x1xf32> to vector<8x128xf32>
    %53 = vector.broadcast %51 : vector<1x128xf32> to vector<8x128xf32>
    %54 = arith.mulf %52, %53 : vector<8x128xf32>
    %55 = arith.addf %49, %54 : vector<8x128xf32>
    %56 = vector.extract_strided_slice %0 {offsets = [0, 35], sizes = [8, 1], strides = [1, 1]} : vector<8x128xf32> to vector<8x1xf32>
    %57 = vector.extract_strided_slice %2 {offsets = [8, 0], sizes = [1, 128], strides = [1, 1]} : vector<16x128xf32> to vector<1x128xf32>
    %58 = vector.broadcast %56 : vector<8x1xf32> to vector<8x128xf32>
    %59 = vector.broadcast %57 : vector<1x128xf32> to vector<8x128xf32>
    %60 = arith.mulf %58, %59 : vector<8x128xf32>
    %61 = arith.addf %55, %60 : vector<8x128xf32>
    %62 = vector.extract_strided_slice %0 {offsets = [0, 36], sizes = [8, 1], strides = [1, 1]} : vector<8x128xf32> to vector<8x1xf32>
    %63 = vector.extract_strided_slice %2 {offsets = [9, 0], sizes = [1, 128], strides = [1, 1]} : vector<16x128xf32> to vector<1x128xf32>
    %64 = vector.broadcast %62 : vector<8x1xf32> to vector<8x128xf32>
    %65 = vector.broadcast %63 : vector<1x128xf32> to vector<8x128xf32>
    %66 = arith.mulf %64, %65 : vector<8x128xf32>
    %67 = arith.addf %61, %66 : vector<8x128xf32>
    %cst_16 = arith.constant 0.000000e+00 : f32
    %68 = vector.broadcast %cst_16 : f32 to vector<8x128xf32>
    %69 = arith.maximumf %67, %68 : vector<8x128xf32>
    %70 = vector.broadcast %7 : vector<1x128xf32> to vector<8x128xf32>
    %71 = arith.mulf %69, %70 : vector<8x128xf32>
    %cst_17 = arith.constant dense<0.000000e+00> : vector<8xf32>
    %72 = vector.multi_reduction <add>, %71, %cst_17 [1] : vector<8x128xf32> to vector<8xf32>
    %73 = vector.shape_cast %72 : vector<8xf32> to vector<8x1xf32>
    %74 = vector.broadcast %8 : vector<1x1xf32> to vector<8x1xf32>
    %75 = arith.addf %73, %74 : vector<8x1xf32>
    %76 = vector.shape_cast %75 : vector<8x1xf32> to vector<8x1xf32>
    %77 = vector.broadcast %76 : vector<8x1xf32> to vector<8x128xf32>
    %c0_18 = arith.constant 0 : index
    %c0_19 = arith.constant 0 : index
    %c0_20 = arith.constant 0 : index
    %78 = vector.load %arg4[%c0_18, %c0_19, %c0_20] : memref<1x8x128xf32, #tpu.memory_space<vmem>>, vector<1x8x128xf32>
    %79 = vector.shape_cast %78 : vector<1x8x128xf32> to vector<8x128xf32>
    %80 = vector.shape_cast %77 : vector<8x128xf32> to vector<1x8x128xf32>
    tpu.vector_store %arg4[%c0_18, %c0_19, %c0_20], %80 {strides = array<i32>} : memref<1x8x128xf32, #tpu.memory_space<vmem>>, vector<1x8x128xf32>,
    return
  }
  func.func @transform_0(%arg0: i32) -> (i32, i32) {
    %c0_i32 = arith.constant 0 : i32
    %c0_i32_0 = arith.constant 0 : i32
    %c0_i32_1 = arith.constant 0 : i32
    return %c0_i32, %c0_i32_0 : i32, i32
  }
  func.func @transform_1(%arg0: i32) -> (i32, i32, i32) {
    %c0_i32 = arith.constant 0 : i32
    %c0_i32_0 = arith.constant 0 : i32
    %c0_i32_1 = arith.constant 0 : i32
    return %arg0, %c0_i32, %c0_i32_0 : i32, i32, i32
  }
  func.func @transform_2(%arg0: i32) -> (i32, i32, i32) {
    %c0_i32 = arith.constant 0 : i32
    %c0_i32_0 = arith.constant 0 : i32
    %c0_i32_1 = arith.constant 0 : i32
    return %arg0, %c0_i32, %c0_i32_0 : i32, i32, i32
  }
  func.func @transform_3(%arg0: i32) -> (i32, i32, i32) {
    %c0_i32 = arith.constant 0 : i32
    %c0_i32_0 = arith.constant 0 : i32
    %c0_i32_1 = arith.constant 0 : i32
    return %arg0, %c0_i32, %c0_i32_0 : i32, i32, i32
  }
}

</mosaic_0001>

<llo_original>
// kernel: tpu_custom_call.1
$region0: #{tpu_custom_call.1}
  #allocation0 [shape = 'u32[]', space=smem, size = 0x4, offset = 0x4, fixed_abs, tag = 'smem constant byte address 0x4 - core index']
  #allocation1 [shape = 'u32[144,128]{1,0:T(1,128)}', space=vmem, size = 0x12000, scoped, tag = 'internal scratch']
  %s0 = inlined_call_operand.hbm [shape: f32[8,128], index: 0, kind: input, shape index: {}]
  %s1 = inlined_call_operand.hbm [shape: bf16[2,384,128], index: 1, kind: input, shape index: {}]
  %s2 = inlined_call_operand.hbm [shape: f32[2,16,128], index: 2, kind: input, shape index: {}]
  %s3 = inlined_call_operand.hbm [shape: f32[2,8,128], index: 3, kind: output, shape index: {}]
  %s4 = sld [smem:[#allocation0]]
  $region57: #{tpu_custom_call.1} parent=0
    _
  %s6 = ssub.s32 1, %s4
  %s7 = scalar_select 0, %s6, %s4
  $region1: #{tpu_custom_call.1} parent=0
    #allocation2 [shape = 'u8[4096]{0}', space=vmem, size = 0x1000, scoped, tag = 'input window, operand 0, single buffered']
    #allocation3 [shape = 's32[2]{0}', space=sflag, size = 0x8, scoped, tag = 'scoped memory for tpu_custom_call.1']
    #allocation4 [shape = 's32[2]{0}', space=sflag, size = 0x8, scoped, tag = 'scoped memory for tpu_custom_call.1']
    #allocation5 [shape = 'u8[196608]{0}', space=vmem, size = 0x30000, scoped, tag = 'input window, operand 1']
    #allocation6 [shape = 's32[2]{0}', space=sflag, size = 0x8, scoped, tag = 'scoped memory for tpu_custom_call.1']
    #allocation7 [shape = 'u8[16384]{0}', space=vmem, size = 0x4000, scoped, tag = 'input window, operand 2']
    #allocation8 [shape = 'u8[8192]{0}', space=vmem, size = 0x2000, scoped, tag = 'output window, operand 0']
    %8 = vsyncpa [#allocation3], 0
    %9 = vsyncpa [#allocation6], 0
    %s10 = scalar_lea.sflag [#allocation6], 1
    %11 = vsyncpa %s10, 0
    %12 = vsyncpa [#allocation4], 0
    %s13 = scalar_lea.sflag [#allocation4], 1
    %14 = vsyncpa %s13, 0
    loop: start=0, step=1, limit=4
    $region2: #{tpu_custom_call.1} parent=1 // loop_pre_header
      _
    $region3: #{tpu_custom_call.1} parent=1 // loop_header
      %s16 = sphi 0, %s20
      %p17 = scmp.ge.s32.totalorder %s16, 4
      %s24 = sphi 0, %s24
      %s26 = sphi 0, %s24
      %s27 = sphi 0, %s26
      %s41 = sphi 0, %s27
      %s47 = sphi 0, %s49
      %s50 = sphi 0, %s47
      %s51 = sphi 0, %s50
      %s67 = sphi 0, %s51
      %s73 = sphi 0, %s75
      %s76 = sphi 0, %s73
      %s77 = sphi 0, %s76
      %s93 = sphi 0, %s77
      %s99 = sphi 0, %s101
      %s102 = sphi 0, %s99
      %s103 = sphi 0, %s102
      %s119 = sphi 0, %s103
    $region4: #{tpu_custom_call.1} parent=1 // loop_header_branch
      %19 = sbr.rel (%p17) target = $region8
    $region5: #{tpu_custom_call.1} parent=1 // loop_body
      %s21 = ssub.s32 %s16, 1
      %s22 = ssub.s32 %s16, 2
      %s23 = sadd.s32 %s16, 1
      %s25 = sadd.s32 %s24, 1
      %p28 = scmp.eq.s32.totalorder %s16, 1
      %p29 = scmp.ne.s32.totalorder %s24, %s26
      %p30 = scmp.eq.s32.totalorder %s16, 0
      %p31 = por %p29, %p30
      %p32 = scmp.ne.s32.totalorder %s24, %s26
      %p33 = scmp.eq.s32.totalorder %s21, 1
      %p34 = por %p32, %p33
      %p35 = scmp.ne.s32.totalorder %s26, %s27
      %p36 = scmp.eq.s32.totalorder %s21, 0
      %p37 = por %p35, %p36
      %p38 = scmp.ne.s32.totalorder %s26, %s27
      %p39 = scmp.eq.s32.totalorder %s22, 1
      %p40 = por %p38, %p39
      %p42 = scmp.ne.s32.totalorder %s27, %s41
      %p43 = scmp.eq.s32.totalorder %s22, 0
      %p44 = por %p42, %p43
      %s45 = ssub.s32 %s16, %s23
      %p46 = scmp.eq.s32.totalorder %s45, 0
      %s48 = sadd.s32 %s47, 1
      %s49 = scalar_select %p46, %s47, %s48
      %p52 = pneg %p46
      %p53 = scmp.eq.s32.totalorder %s16, 1
      %p54 = por %p52, %p53
      %p55 = scmp.ne.s32.totalorder %s47, %s50
      %p56 = scmp.eq.s32.totalorder %s16, 0
      %p57 = por %p55, %p56
      %p58 = scmp.ne.s32.totalorder %s47, %s50
      %p59 = scmp.eq.s32.totalorder %s21, 1
      %p60 = por %p58, %p59
      %p61 = scmp.ne.s32.totalorder %s50, %s51
      %p62 = scmp.eq.s32.totalorder %s21, 0
      %p63 = por %p61, %p62
      %p64 = scmp.ne.s32.totalorder %s50, %s51
      %p65 = scmp.eq.s32.totalorder %s22, 1
      %p66 = por %p64, %p65
      %p68 = scmp.ne.s32.totalorder %s51, %s67
      %p69 = scmp.eq.s32.totalorder %s22, 0
      %p70 = por %p68, %p69
      %s71 = ssub.s32 %s16, %s23
      %p72 = scmp.eq.s32.totalorder %s71, 0
      %s74 = sadd.s32 %s73, 1
      %s75 = scalar_select %p72, %s73, %s74
      %p78 = pneg %p72
      %p79 = scmp.eq.s32.totalorder %s16, 1
      %p80 = por %p78, %p79
      %p81 = scmp.ne.s32.totalorder %s73, %s76
      %p82 = scmp.eq.s32.totalorder %s16, 0
      %p83 = por %p81, %p82
      %p84 = scmp.ne.s32.totalorder %s73, %s76
      %p85 = scmp.eq.s32.totalorder %s21, 1
      %p86 = por %p84, %p85
      %p87 = scmp.ne.s32.totalorder %s76, %s77
      %p88 = scmp.eq.s32.totalorder %s21, 0
      %p89 = por %p87, %p88
      %p90 = scmp.ne.s32.totalorder %s76, %s77
      %p91 = scmp.eq.s32.totalorder %s22, 1
      %p92 = por %p90, %p91
      %p94 = scmp.ne.s32.totalorder %s77, %s93
      %p95 = scmp.eq.s32.totalorder %s22, 0
      %p96 = por %p94, %p95
      %s97 = ssub.s32 %s16, %s23
      %p98 = scmp.eq.s32.totalorder %s97, 0
      %s100 = sadd.s32 %s99, 1
      %s101 = scalar_select %p98, %s99, %s100
      %p104 = pneg %p98
      %p105 = scmp.eq.s32.totalorder %s16, 1
      %p106 = por %p104, %p105
      %p107 = scmp.ne.s32.totalorder %s99, %s102
      %p108 = scmp.eq.s32.totalorder %s16, 0
      %p109 = por %p107, %p108
      %p110 = scmp.ne.s32.totalorder %s99, %s102
      %p111 = scmp.eq.s32.totalorder %s21, 1
      %p112 = por %p110, %p111
      %p113 = scmp.ne.s32.totalorder %s102, %s103
      %p114 = scmp.eq.s32.totalorder %s21, 0
      %p115 = por %p113, %p114
      %p116 = scmp.ne.s32.totalorder %s102, %s103
      %p117 = scmp.eq.s32.totalorder %s22, 1
      %p118 = por %p116, %p117
      %p120 = scmp.ne.s32.totalorder %s103, %s119
      %p121 = scmp.eq.s32.totalorder %s22, 0
      %p122 = por %p120, %p121
      %p123 = scmp.le.s32.totalorder 1, %s16
      %p124 = scmp.lt.s32.totalorder %s16, 3
      %p125 = pnand %p123, %p124
      %p126 = pneg %p125
      // Predicated region
      $region9: #{tpu_custom_call.1} parent=5 // pred_check
        _
      $region10: #{tpu_custom_call.1} parent=5 // pred_check_branch
        %128 = sbr.rel (%p125) target = $region12
      $region11: #{tpu_custom_call.1} parent=5 // pred_region
        %s129 = ssub.s32 %s16, 1
        // Predicated region
        $region13: #{tpu_custom_call.1} parent=11 // pred_check
          %p130 = pneg %p37
        $region14: #{tpu_custom_call.1} parent=11 // pred_check_branch
          %132 = sbr.rel (%p130) target = $region16
        $region15: #{tpu_custom_call.1} parent=11 // pred_region
          %s134 = ssub.s32 128, 128
          %135 = vsyncadd [#allocation3], %s134
          %s137 = sshll.u32 [#allocation2], 4
          %s138 = int_to_ptr.vmem [resolvable:$true] %s137
          %140 = dma.hbm_to_vmem [thread:$0]  %s0, 128, %s138, [#allocation3]
        $region16: #{tpu_custom_call.1} parent=11 // pred_fallthru
          _
      $region12: #{tpu_custom_call.1} parent=5 // pred_fallthru
        _
      %p141 = scmp.lt.s32.totalorder %s16, 2
      // Predicated region
      $region17: #{tpu_custom_call.1} parent=5 // pred_check
        %p142 = pneg %p141
      $region18: #{tpu_custom_call.1} parent=5 // pred_check_branch
        %144 = sbr.rel (%p142) target = $region20
      $region19: #{tpu_custom_call.1} parent=5 // pred_region
        // Predicated region
        $region21: #{tpu_custom_call.1} parent=19 // pred_check
          %p145 = pneg %p57
        $region22: #{tpu_custom_call.1} parent=19 // pred_check_branch
          %147 = sbr.rel (%p145) target = $region24
        $region23: #{tpu_custom_call.1} parent=19 // pred_region
          %s148 = sand.u32 %s16, 1
          %s149 = scalar_lea.sflag [#allocation6], %s148
          %s150 = sand.u32 %s47, 1
          %s151 = smul.addr %s150, 192
          %s152 = scalar_lea.vmem [#allocation5], %s151
          %s154 = ssub.s32 3072, 3072
          %155 = vsyncadd %s149, %s154
          %s156 = smul.addr %s16, 48
          %s157 = smul.addr %s156, 64
          %s158 = scalar_lea.hbm %s1, %s157
          %s159 = sshll.u32 %s152, 4
          %s160 = int_to_ptr.vmem [resolvable:$true] %s159
          %165 = dma.hbm_to_vmem [thread:$0]  %s158, 3072, %s160, %s149, 64, 64, 4
        $region24: #{tpu_custom_call.1} parent=19 // pred_fallthru
          _
        // Predicated region
        $region25: #{tpu_custom_call.1} parent=19 // pred_check
          %p166 = pneg %p83
        $region26: #{tpu_custom_call.1} parent=19 // pred_check_branch
          %168 = sbr.rel (%p166) target = $region28
        $region27: #{tpu_custom_call.1} parent=19 // pred_region
          %s169 = sand.u32 %s16, 1
          %s170 = scalar_lea.sflag [#allocation6], %s169
          %s171 = sand.u32 %s73, 1
          %s172 = smul.addr %s171, 16
          %s173 = scalar_lea.vmem [#allocation7], %s172
          %s175 = ssub.s32 256, 256
          %176 = vsyncadd %s170, %s175
          %s177 = smul.addr %s16, 2
          %s178 = smul.addr %s177, 128
          %s179 = scalar_lea.hbm %s2, %s178
          %s180 = sshll.u32 %s173, 4
          %s181 = int_to_ptr.vmem [resolvable:$true] %s180
          %186 = dma.hbm_to_vmem [thread:$0]  %s179, 256, %s181, %s170, 128, 128, 8
        $region28: #{tpu_custom_call.1} parent=19 // pred_fallthru
          _
      $region20: #{tpu_custom_call.1} parent=5 // pred_fallthru
        _
      %p187 = scmp.le.s32.totalorder 1, %s16
      %p188 = scmp.lt.s32.totalorder %s16, 3
      %p189 = pnand %p187, %p188
      %p190 = pneg %p189
      // Predicated region
      $region29: #{tpu_custom_call.1} parent=5 // pred_check
        _
      $region30: #{tpu_custom_call.1} parent=5 // pred_check_branch
        %192 = sbr.rel (%p189) target = $region32
      $region31: #{tpu_custom_call.1} parent=5 // pred_region
        %s193 = ssub.s32 %s16, 1
        // Predicated region
        $region33: #{tpu_custom_call.1} parent=31 // pred_check
          %p194 = pneg %p37
        $region34: #{tpu_custom_call.1} parent=31 // pred_check_branch
          %196 = sbr.rel (%p194) target = $region36
        $region35: #{tpu_custom_call.1} parent=31 // pred_region
          %197 = dma.done [#allocation3], 128
        $region36: #{tpu_custom_call.1} parent=31 // pred_fallthru
          _
        %s198 = sand.u32 %s21, 1
        %s199 = scalar_lea.sflag [#allocation6], %s198
        %s200 = sand.u32 %s50, 1
        %s201 = smul.addr %s200, 192
        %s202 = scalar_lea.vmem [#allocation5], %s201
        // Predicated region
        $region37: #{tpu_custom_call.1} parent=31 // pred_check
          %p203 = pneg %p63
        $region38: #{tpu_custom_call.1} parent=31 // pred_check_branch
          %205 = sbr.rel (%p203) target = $region40
        $region39: #{tpu_custom_call.1} parent=31 // pred_region
          %206 = dma.done %s199, 3072
        $region40: #{tpu_custom_call.1} parent=31 // pred_fallthru
          _
        %s207 = sand.u32 %s21, 1
        %s208 = scalar_lea.sflag [#allocation6], %s207
        %s209 = sand.u32 %s76, 1
        %s210 = smul.addr %s209, 16
        %s211 = scalar_lea.vmem [#allocation7], %s210
        // Predicated region
        $region41: #{tpu_custom_call.1} parent=31 // pred_check
          %p212 = pneg %p89
        $region42: #{tpu_custom_call.1} parent=31 // pred_check_branch
          %214 = sbr.rel (%p212) target = $region44
        $region43: #{tpu_custom_call.1} parent=31 // pred_region
          %215 = dma.done %s208, 256
        $region44: #{tpu_custom_call.1} parent=31 // pred_fallthru
          _
        %p216 = pneg %p37
        %p217 = pneg %p34
        %s218 = sand.u32 %s21, 1
        %s219 = scalar_lea.sflag [#allocation6], %s218
        %s220 = sand.u32 %s50, 1
        %s221 = smul.addr %s220, 192
        %s222 = scalar_lea.vmem [#allocation5], %s221
        %p223 = pneg %p63
        %p224 = pneg %p60
        %s225 = sand.u32 %s21, 1
        %s226 = scalar_lea.sflag [#allocation6], %s225
        %s227 = sand.u32 %s76, 1
        %s228 = smul.addr %s227, 16
        %s229 = scalar_lea.vmem [#allocation7], %s228
        %p230 = pneg %p89
        %p231 = pneg %p86
        %p232 = pneg %p115
        %p233 = pneg %p112
        %s234 = sand.u32 %s102, 1
        %s235 = scalar_lea.sflag [#allocation4], %s234
        %s236 = sand.u32 %s102, 1
        %s237 = smul.addr %s236, 8
        %s238 = scalar_lea.vmem [#allocation8], %s237
        %v240 = vld [vmem:[#allocation2] sm:$0xff]
        %v241 = vld [vmem:[%s211] sm:$0xff]
        %v242 = vld [vmem:[%s211 + $0x8] sm:$0xff]
        %v243 = vpack.c.bf16 %v240, %v240
        %v244 = vld [vmem:[%s202] sm:$0xf]
        %v245 = vld [vmem:[%s202 + $0x4] sm:$0xf]
        %v246 = vld [vmem:[%s202 + $0x8] sm:$0xf]
        %v247 = vld [vmem:[%s202 + $0xc] sm:$0xf]
        %v248 = vld [vmem:[%s202 + $0x10] sm:$0xf]
        %v249 = vld [vmem:[%s202 + $0x14] sm:$0xf]
        %v250 = vld [vmem:[%s202 + $0x18] sm:$0xf]
        %v251 = vld [vmem:[%s202 + $0x1c] sm:$0xf]
        %v252 = vld [vmem:[%s202 + $0x20] sm:$0xf]
        %v253 = vld [vmem:[%s202 + $0x24] sm:$0xf]
        %v254 = vld [vmem:[%s202 + $0x28] sm:$0xf]
        %v255 = vld [vmem:[%s202 + $0x2c] sm:$0xf]
        %v256 = vld [vmem:[%s202 + $0x30] sm:$0xf]
        %v257 = vld [vmem:[%s202 + $0x34] sm:$0xf]
        %v258 = vld [vmem:[%s202 + $0x38] sm:$0xf]
        %v259 = vld [vmem:[%s202 + $0x3c] sm:$0xf]
        %v260 = vlaneseq
        %v261 = vshrl.u32 %v260, 7
        %v262 = vsub.s32 0, %v261
        %v263 = vrot.slane %v241, %v262
        %v280 = vunpack.c.l.b16 %v244
        %v281 = vunpack.c.l.b16 %v245
        %v282 = vunpack.c.l.b16 %v246
        %v283 = vunpack.c.l.b16 %v247
        %v284 = vunpack.c.l.b16 %v248
        %v285 = vunpack.c.l.b16 %v249
        %v286 = vunpack.c.l.b16 %v250
        %v287 = vunpack.c.l.b16 %v251
        %v288 = vunpack.c.l.b16 %v252
        %v289 = vunpack.c.l.b16 %v253
        %v290 = vunpack.c.l.b16 %v254
        %v291 = vunpack.c.l.b16 %v255
        %v292 = vunpack.c.l.b16 %v256
        %v293 = vunpack.c.l.b16 %v257
        %v294 = vunpack.c.l.b16 %v258
        %v295 = vunpack.c.l.b16 %v259
        %v296 = vpack.c.b16 %v281, %v280
        %v297 = vpack.c.b16 %v283, %v282
        %v298 = vpack.c.b16 %v285, %v284
        %v299 = vpack.c.b16 %v287, %v286
        %v300 = vpack.c.b16 %v289, %v288
        %v301 = vpack.c.b16 %v291, %v290
        %v302 = vpack.c.b16 %v293, %v292
        %v303 = vpack.c.b16 %v295, %v294
        %312 = vmatprep.subr.bf16.mxu0 0
        %313 = vmatpush1.bf16.msra.mxu0 %v303
        %314 = vmatprep.subr.bf16.mxu0 0
        %315 = vmatpush1.bf16.msra.mxu0 %v302
        %316 = vmatprep.subr.bf16.mxu0 0
        %317 = vmatpush1.bf16.msra.mxu0 %v301
        %318 = vmatprep.subr.bf16.mxu0 0
        %319 = vmatpush1.bf16.msra.mxu0 %v300
        %320 = vmatprep.subr.bf16.mxu0 0
        %321 = vmatpush1.bf16.msra.mxu0 %v299
        %322 = vmatprep.subr.bf16.mxu0 0
        %323 = vmatpush1.bf16.msra.mxu0 %v298
        %324 = vmatprep.subr.bf16.mxu0 0
        %325 = vmatpush1.bf16.msra.mxu0 %v297
        %326 = vmatprep.subr.bf16.mxu0 0
        %327 = vmatpush1.bf16.msra.mxu0 %v296
        %328 = vmatprep.subr.bf16.mxu0 0
        %329 = vmatpush2.bf16.msra.mxu0 0
        %330 = vmatprep.subr.bf16.mxu0 0
        %331 = vmatpush2.bf16.msra.mxu0 0
        %332 = vmatprep.subr.bf16.mxu0 0
        %333 = vmatpush2.bf16.msra.mxu0 0
        %334 = vmatprep.subr.bf16.mxu0 0
        %335 = vmatpush2.bf16.msra.mxu0 0
        %336 = vmatprep.subr.bf16.mxu0 0
        %337 = vmatpush2.bf16.msra.mxu0 0
        %338 = vmatprep.subr.bf16.mxu0 0
        %339 = vmatpush2.bf16.msra.mxu0 0
        %340 = vmatprep.subr.bf16.mxu0 0
        %341 = vmatpush2.bf16.msra.mxu0 0
        %342 = vmatprep.subr.bf16.mxu0 0
        %343 = vmatpush2.bf16.msra.mxu0 0
        %344 = vmatprep.mubr.bf16.mxu0 0
        %345 = vmatmul.mubr.bf16.gmra.mxu0 %v243
        %v346 = vpop.f32.mrf.mxu0
        %v347 = vadd.f32 %v263, %v346
        %v348 = vpop.f32.mrf.mxu0
        %v349 = vpop.f32.mrf.mxu0
        %v350 = vpop.f32.mrf.mxu0
        %351 = vdwg.mxu0
        %v352 = vmax.f32 %v347, 0.0
        %v353 = vrot.slane %v352, 4
        %v354 = vadd.f32 %v352, %v353
        %v355 = vrot.slane %v354, 2
        %v356 = vadd.f32 %v354, %v355
        %v357 = vrot.slane %v356, 1
        %v358 = vadd.f32 %v356, %v357
        %v359 = vrcp.pop 8.0
        %v360 = vmul.f32 %v358, %v359
        %v361 = vsub.f32 %v352, %v360
        %v362 = vmul.f32 %v361, %v361
        %v363 = vrot.slane %v362, 4
        %v364 = vadd.f32 %v362, %v363
        %v365 = vrot.slane %v364, 2
        %v366 = vadd.f32 %v364, %v365
        %v367 = vrot.slane %v366, 1
        %v368 = vadd.f32 %v366, %v367
        %v369 = vmul.f32 %v368, %v359
        %v370 = vadd.f32 %v369, 1e-05
        %v371 = vrsqrt.pop %v370
        %v372 = vmul.f32 %v241, %v371
        %v373 = vmul.f32 %v360, %v372
        %v375 = vrot.slane %v373, 7
        %v377 = vsub.f32 %v241, %v375
        %v378 = vlaneseq
        %v379 = vshrl.u32 %v378, 7
        %v380 = vsub.s32 1, %v379
        %v381 = vrot.slane %v372, %v380
        %v382 = vmul.f32 %v352, %v381
        %v383 = vlaneseq
        %v384 = vshrl.u32 %v383, 7
        %v385 = vsub.s32 2, %v384
        %v386 = vrot.slane %v377, %v385
        %v387 = vadd.f32 %v382, %v386
        %v388 = vpack.c.bf16 %v387, %v387
        %v389 = vld [vmem:[%s202 + $0x40] sm:$0xf]
        %v390 = vld [vmem:[%s202 + $0x44] sm:$0xf]
        %v391 = vld [vmem:[%s202 + $0x48] sm:$0xf]
        %v392 = vld [vmem:[%s202 + $0x4c] sm:$0xf]
        %v393 = vld [vmem:[%s202 + $0x50] sm:$0xf]
        %v394 = vld [vmem:[%s202 + $0x54] sm:$0xf]
        %v395 = vld [vmem:[%s202 + $0x58] sm:$0xf]
        %v396 = vld [vmem:[%s202 + $0x5c] sm:$0xf]
        %v397 = vld [vmem:[%s202 + $0x60] sm:$0xf]
        %v398 = vld [vmem:[%s202 + $0x64] sm:$0xf]
        %v399 = vld [vmem:[%s202 + $0x68] sm:$0xf]
        %v400 = vld [vmem:[%s202 + $0x6c] sm:$0xf]
        %v401 = vld [vmem:[%s202 + $0x70] sm:$0xf]
        %v402 = vld [vmem:[%s202 + $0x74] sm:$0xf]
        %v403 = vld [vmem:[%s202 + $0x78] sm:$0xf]
        %v404 = vld [vmem:[%s202 + $0x7c] sm:$0xf]
        %v405 = vlaneseq
        %v406 = vshrl.u32 %v405, 7
        %v407 = vsub.s32 3, %v406
        %v408 = vrot.slane %v241, %v407
        %v425 = vunpack.c.l.b16 %v389
        %v426 = vunpack.c.l.b16 %v390
        %v427 = vunpack.c.l.b16 %v391
        %v428 = vunpack.c.l.b16 %v392
        %v429 = vunpack.c.l.b16 %v393
        %v430 = vunpack.c.l.b16 %v394
        %v431 = vunpack.c.l.b16 %v395
        %v432 = vunpack.c.l.b16 %v396
        %v433 = vunpack.c.l.b16 %v397
        %v434 = vunpack.c.l.b16 %v398
        %v435 = vunpack.c.l.b16 %v399
        %v436 = vunpack.c.l.b16 %v400
        %v437 = vunpack.c.l.b16 %v401
        %v438 = vunpack.c.l.b16 %v402
        %v439 = vunpack.c.l.b16 %v403
        %v440 = vunpack.c.l.b16 %v404
        %v441 = vpack.c.b16 %v426, %v425
        %v442 = vpack.c.b16 %v428, %v427
        %v443 = vpack.c.b16 %v430, %v429
        %v444 = vpack.c.b16 %v432, %v431
        %v445 = vpack.c.b16 %v434, %v433
        %v446 = vpack.c.b16 %v436, %v435
        %v447 = vpack.c.b16 %v438, %v437
        %v448 = vpack.c.b16 %v440, %v439
        %457 = vmatprep.subr.bf16.mxu0 0
        %458 = vmatpush1.bf16.msra.mxu0 %v448
        %459 = vmatprep.subr.bf16.mxu0 0
        %460 = vmatpush1.bf16.msra.mxu0 %v447
        %461 = vmatprep.subr.bf16.mxu0 0
        %462 = vmatpush1.bf16.msra.mxu0 %v446
        %463 = vmatprep.subr.bf16.mxu0 0
        %464 = vmatpush1.bf16.msra.mxu0 %v445
        %465 = vmatprep.subr.bf16.mxu0 0
        %466 = vmatpush1.bf16.msra.mxu0 %v444
        %467 = vmatprep.subr.bf16.mxu0 0
        %468 = vmatpush1.bf16.msra.mxu0 %v443
        %469 = vmatprep.subr.bf16.mxu0 0
        %470 = vmatpush1.bf16.msra.mxu0 %v442
        %471 = vmatprep.subr.bf16.mxu0 0
        %472 = vmatpush1.bf16.msra.mxu0 %v441
        %473 = vmatprep.subr.bf16.mxu0 0
        %474 = vmatpush2.bf16.msra.mxu0 0
        %475 = vmatprep.subr.bf16.mxu0 0
        %476 = vmatpush2.bf16.msra.mxu0 0
        %477 = vmatprep.subr.bf16.mxu0 0
        %478 = vmatpush2.bf16.msra.mxu0 0
        %479 = vmatprep.subr.bf16.mxu0 0
        %480 = vmatpush2.bf16.msra.mxu0 0
        %481 = vmatprep.subr.bf16.mxu0 0
        %482 = vmatpush2.bf16.msra.mxu0 0
        %483 = vmatprep.subr.bf16.mxu0 0
        %484 = vmatpush2.bf16.msra.mxu0 0
        %485 = vmatprep.subr.bf16.mxu0 0
        %486 = vmatpush2.bf16.msra.mxu0 0
        %487 = vmatprep.subr.bf16.mxu0 0
        %488 = vmatpush2.bf16.msra.mxu0 0
        %489 = vmatprep.mubr.bf16.mxu0 0
        %490 = vmatmul.mubr.bf16.gmra.mxu0 %v388
        %v491 = vpop.f32.mrf.mxu0
        %v492 = vadd.f32 %v408, %v491
        %v493 = vpop.f32.mrf.mxu0
        %v494 = vpop.f32.mrf.mxu0
        %v495 = vpop.f32.mrf.mxu0
        %496 = vdwg.mxu0
        %498 = vset.pattern.permute.xlu0 33
        %499 = vperm.xlu0 %498, %v240
        %v500 = vpop.permute.xlu0 %499
        %v502 = vlaneseq
        %v503 = vshrl.u32 %v502, 7
        %v504 = vsub.s32 6, %v503
        %v505 = vrot.slane %v241, %v504
        %v506 = vmul.f32 %v500, %v505
        %v507 = vadd.f32 %v492, %v506
        %508 = vset.pattern.permute.xlu0 34
        %509 = vperm.xlu0 %508, %v240
        %v510 = vpop.permute.xlu0 %509
        %v512 = vlaneseq
        %v513 = vshrl.u32 %v512, 7
        %v514 = vsub.s32 7, %v513
        %v515 = vrot.slane %v241, %v514
        %v516 = vmul.f32 %v510, %v515
        %v517 = vadd.f32 %v507, %v516
        %518 = vset.pattern.permute.xlu0 35
        %519 = vperm.xlu0 %518, %v240
        %v520 = vpop.permute.xlu0 %519
        %v522 = vlaneseq
        %v523 = vshrl.u32 %v522, 7
        %v524 = vsub.s32 0, %v523
        %v525 = vrot.slane %v242, %v524
        %v526 = vmul.f32 %v520, %v525
        %v527 = vadd.f32 %v517, %v526
        %528 = vset.pattern.permute.xlu0 36
        %529 = vperm.xlu0 %528, %v240
        %v530 = vpop.permute.xlu0 %529
        %v532 = vlaneseq
        %v533 = vshrl.u32 %v532, 7
        %v534 = vsub.s32 1, %v533
        %v535 = vrot.slane %v242, %v534
        %v536 = vmul.f32 %v530, %v535
        %v537 = vadd.f32 %v527, %v536
        %v538 = vmax.f32 %v537, 0.0
        %v539 = vlaneseq
        %v540 = vshrl.u32 %v539, 7
        %v541 = vsub.s32 4, %v540
        %v542 = vrot.slane %v241, %v541
        %v543 = vmul.f32 %v538, %v542
        %544 = vadd.xlane.f32.xlu0 %v543
        %v545 = vpop.xlane.xlu0 %544
        %v546 = vlaneseq
        %v547 = vshrl.u32 %v546, 7
        %v548 = vsub.s32 5, %v547
        %v549 = vrot.slane %v241, %v548
        %v550 = vadd.f32 %v545, %v549
        %552 = vset.pattern.permute.xlu0 0
        %553 = vperm.xlu0 %552, %v550
        %v554 = vpop.permute.xlu0 %553
        %556 = vst [vmem:[%s238] sm:$0xff] %v554
        %s557 = sand.u32 %s102, 1
        %s558 = scalar_lea.sflag [#allocation4], %s557
        %s559 = sand.u32 %s102, 1
        %s560 = smul.addr %s559, 8
        %s561 = scalar_lea.vmem [#allocation8], %s560
        // Predicated region
        $region45: #{tpu_custom_call.1} parent=31 // pred_check
          %p562 = pneg %p112
        $region46: #{tpu_custom_call.1} parent=31 // pred_check_branch
          %564 = sbr.rel (%p562) target = $region48
        $region47: #{tpu_custom_call.1} parent=31 // pred_region
          %s566 = ssub.s32 128, 128
          %567 = vsyncadd %s558, %s566
          %s568 = smul.addr %s21, 128
          %s569 = scalar_lea.hbm %s3, %s568
          %s571 = sshll.u32 %s561, 4
          %s572 = int_to_ptr.vmem [resolvable:$true] %s571
          %574 = dma.vmem_to_hbm [thread:$0]  %s572, 128, %s569, %s558
        $region48: #{tpu_custom_call.1} parent=31 // pred_fallthru
          _
      $region32: #{tpu_custom_call.1} parent=5 // pred_fallthru
        _
      %p575 = scmp.le.s32.totalorder 2, %s16
      // Predicated region
      $region49: #{tpu_custom_call.1} parent=5 // pred_check
        %p576 = pneg %p575
      $region50: #{tpu_custom_call.1} parent=5 // pred_check_branch
        %578 = sbr.rel (%p576) target = $region52
      $region51: #{tpu_custom_call.1} parent=5 // pred_region
        %s579 = ssub.s32 %s16, 2
        // Predicated region
        $region53: #{tpu_custom_call.1} parent=51 // pred_check
          %p580 = pneg %p118
        $region54: #{tpu_custom_call.1} parent=51 // pred_check_branch
          %582 = sbr.rel (%p580) target = $region56
        $region55: #{tpu_custom_call.1} parent=51 // pred_region
          %s583 = sand.u32 %s103, 1
          %s584 = scalar_lea.sflag [#allocation4], %s583
          %s585 = sand.u32 %s103, 1
          %s586 = smul.addr %s585, 8
          %s587 = scalar_lea.vmem [#allocation8], %s586
          %588 = dma.done %s584, 128
        $region56: #{tpu_custom_call.1} parent=51 // pred_fallthru
          _
      $region52: #{tpu_custom_call.1} parent=5 // pred_fallthru
        _
    $region6: #{tpu_custom_call.1} parent=1 // loop_footer
      %s20 = sadd.s32 1, %s16
    $region7: #{tpu_custom_call.1} parent=1 // loop_footer_branch
      %15 = sbr.rel target = $region3
    $region8: #{tpu_custom_call.1} parent=1 // loop_exit
      _
    %589 = vsyncpa [#allocation3], 1
    %s590 = scalar_lea.sflag [#allocation3], 1
    %591 = vsyncpa %s590, 1
    %592 = vsyncpa [#allocation6], 1
    %s593 = scalar_lea.sflag [#allocation6], 1
    %594 = vsyncpa %s593, 1
    %595 = vsyncpa [#allocation4], 1
    %s596 = scalar_lea.sflag [#allocation4], 1
    %597 = vsyncpa %s596, 1

</llo_original>
